<compile_context>
chip_gen: v6e
topology: v6e:2x2x1
jax: 0.10.0
libtpu: 0.0.40
codegen_flags: <defaults>
</compile_context>

<pallas_src>
import math

import jax
import jax.numpy as jnp
from jax.experimental import pallas as pl
from jax.experimental.pallas import tpu as pltpu


_VMEM = pl.BlockSpec(memory_space=pltpu.MemorySpace.VMEM)


# ----------------------------------------------------------------------------
# Embedding gather: scalar-prefetched ids drive the index_map; one table row is
# DMA'd from HBM per grid step (O(B*T*E) bytes instead of an O(B*T*V) matmul).
# ----------------------------------------------------------------------------
def gather_kernel(ids_smem_ref, row_ref, out_ref):
    del ids_smem_ref  # only used by the index_maps
    out_ref[...] = row_ref[...]


def embedding_lookup(ids, emb):
    B, T = ids.shape
    V, E = emb.shape
    n_tok = B * T
    ids_flat = ids.reshape(n_tok).astype(jnp.int32)
    emb3 = emb.reshape(V, 1, E)  # 3-D so the (1, 1, E) block matches full dims

    out = pl.pallas_call(
        gather_kernel,
        out_shape=jax.ShapeDtypeStruct((n_tok, 1, E), jnp.float32),
        grid_spec=pltpu.PrefetchScalarGridSpec(
            num_scalar_prefetch=1,
            grid=(n_tok,),
            in_specs=[pl.BlockSpec((1, 1, E),
                                   lambda i, ids_ref: (ids_ref[i], 0, 0))],
            out_specs=pl.BlockSpec((1, 1, E),
                                   lambda i, ids_ref: (i, 0, 0)),
        ),
        compiler_params=pltpu.CompilerParams(
            dimension_semantics=("arbitrary",)),
    )(ids_flat, emb3)
    return out.reshape(B, T, E)


# ----------------------------------------------------------------------------
# Fused multi-layer bidirectional LSTM + classifier kernel.
#   x_ref    : (T, B, E)          time-major, batch padded to a multiple of 8
#   w_ih_ref : (L, 2, Dmax, 4H)   layer-0 rows [0:E] real, rest zero-padded
#   w_hh_ref : (L, 2, H, 4H)
#   b_ref    : (L, 2, 1, 4H)      b_ih + b_hh
#   cw_ref   : (2H, F), cb_ref : (1, F)
#   out_ref  : (B, F)
# ----------------------------------------------------------------------------
def lstm_classifier_kernel(x_ref, w_ih_ref, w_hh_ref, b_ref, cw_ref, cb_ref,
                           out_ref, xw_f, xw_b, hf_all, hb_all):
    T, B, E = x_ref.shape
    L = w_ih_ref.shape[0]
    H = w_hh_ref.shape[2]
    G = 4 * H

    def run_layer(layer_idx, xw_fn):
        # Hoisted input projection: one big (T*B, Din) x (Din, 4H) matmul per
        # direction, written time-major so per-step reads are dense (B, 4H).
        xw_f[...] = xw_fn(0).reshape(T, B, G)
        xw_b[...] = xw_fn(1).reshape(T, B, G)
        w_hh_fwd = w_hh_ref[layer_idx, 0]
        w_hh_bwd = w_hh_ref[layer_idx, 1]

        def cell(gates, c):
            # NOTE: with H < 128 these gate slices are sub-lane (masked) VPU
            # ops; pad H to a multiple of 128 for full vreg utilization.
            i_g = jax.nn.sigmoid(gates[:, 0:H])
            f_g = jax.nn.sigmoid(gates[:, H:2 * H])
            g_g = jnp.tanh(gates[:, 2 * H:3 * H])
            o_g = jax.nn.sigmoid(gates[:, 3 * H:4 * H])
            c_new = f_g * c + i_g * g_g
            return o_g * jnp.tanh(c_new), c_new

        def step(t, carry):
            h_f, c_f, h_b, c_b = carry
            tb = T - 1 - t
            # Only the truly sequential part stays in the loop: h @ W_hh.
            g_f = xw_f[t] + jnp.dot(h_f, w_hh_fwd,
                                    preferred_element_type=jnp.float32)
            g_b = xw_b[tb] + jnp.dot(h_b, w_hh_bwd,
                                     preferred_element_type=jnp.float32)
            h_f, c_f = cell(g_f, c_f)
            h_b, c_b = cell(g_b, c_b)
            hf_all[t] = h_f     # time-major: contiguous (B, H) stores
            hb_all[tb] = h_b
            return h_f, c_f, h_b, c_b

        zero = jnp.zeros((B, H), jnp.float32)
        jax.lax.fori_loop(0, T, step, (zero, zero, zero, zero), unroll=True)

    # ---- layer 0: input is the embedded sequence --------------------------
    x2 = x_ref[...].reshape(T * B, E)

    def xw_layer0(d):
        w = w_ih_ref[0, d]                       # (Dmax, 4H)
        return (jnp.dot(x2, w[0:E, :], preferred_element_type=jnp.float32)
                + b_ref[0, d])

    run_layer(0, xw_layer0)

    # ---- layers 1..L-1: input is concat(fwd, bwd) of the previous layer ----
    for l in range(1, L):
        hf2 = hf_all[...].reshape(T * B, H)
        hb2 = hb_all[...].reshape(T * B, H)

        def xw_layer(d, l=l, hf2=hf2, hb2=hb2):
            w = w_ih_ref[l, d]                   # (Dmax, 4H)
            return (jnp.dot(hf2, w[0:H, :], preferred_element_type=jnp.float32)
                    + jnp.dot(hb2, w[H:2 * H, :],
                              preferred_element_type=jnp.float32)
                    + b_ref[l, d])

        run_layer(l, xw_layer)

    # ---- last timestep + classifier (eval-mode dropout == identity) -------
    h_last_f = hf_all[T - 1]                     # fwd hidden at t = T-1
    h_last_b = hb_all[T - 1]                     # bwd output at position T-1
    # feature_n is tiny (masked store on the last dim) -- acceptable here.
    logits = (jnp.dot(h_last_f, cw_ref[0:H, :],
                      preferred_element_type=jnp.float32)
              + jnp.dot(h_last_b, cw_ref[H:2 * H, :],
                        preferred_element_type=jnp.float32)
              + cb_ref[...])
    out_ref[...] = logits


# ----------------------------------------------------------------------------
# Parameter init (PyTorch-like shapes; uniform(-1/sqrt(H), 1/sqrt(H)))
# ----------------------------------------------------------------------------
def init_params(key, n_vocab, embedding_dim, hidden_dim, n_layers, feature_n):
    H, E = hidden_dim, embedding_dim
    d_max = max(E, 2 * H)
    bound = 1.0 / math.sqrt(H)
    k_emb, k_lstm, k_cls = jax.random.split(key, 3)

    emb = jax.random.normal(k_emb, (n_vocab, E), jnp.float32)
    emb = emb.at[0].set(0.0)  # padding_idx=0 row is zero

    def u(k, shape, b):
        return jax.random.uniform(k, shape, jnp.float32, -b, b)

    w_ih = jnp.zeros((n_layers, 2, d_max, 4 * H), jnp.float32)
    w_hh = jnp.zeros((n_layers, 2, H, 4 * H), jnp.float32)
    b_g = jnp.zeros((n_layers, 2, 1, 4 * H), jnp.float32)
    for l in range(n_layers):
        d_in = E if l == 0 else 2 * H
        for d in range(2):
            kw = jax.random.split(jax.random.fold_in(k_lstm, l * 2 + d), 4)
            w_ih = w_ih.at[l, d, :d_in, :].set(u(kw[0], (d_in, 4 * H), bound))
            w_hh = w_hh.at[l, d].set(u(kw[1], (H, 4 * H), bound))
            b_g = b_g.at[l, d].set(u(kw[2], (1, 4 * H), bound)
                                   + u(kw[3], (1, 4 * H), bound))

    cls_in = 2 * H
    cls_bound = 1.0 / math.sqrt(cls_in)
    k_w, k_b = jax.random.split(k_cls)
    classifier = {'w': u(k_w, (cls_in, feature_n), cls_bound),
                  'b': u(k_b, (1, feature_n), cls_bound)}
    return {'embedding': emb, 'w_ih': w_ih, 'w_hh': w_hh, 'b': b_g,
            'classifier': classifier}


# ----------------------------------------------------------------------------
# Forward pass (inference semantics: dropout == identity)
# ----------------------------------------------------------------------------
def sentence_classifier_forward(params, ids):
    B, T = ids.shape
    emb = params['embedding']
    H = params['w_hh'].shape[2]
    F = params['classifier']['w'].shape[1]

    x = embedding_lookup(ids, emb)                       # (B, T, E)

    # Pad batch to a full sublane tile (8) and switch to time-major layout.
    b_pad = ((B + 7) // 8) * 8
    if b_pad != B:
        x = jnp.pad(x, ((0, b_pad - B), (0, 0), (0, 0)))
    x_tm = jnp.transpose(x, (1, 0, 2))                   # (T, b_pad, E)

    # TODO(synk): single-program kernel -- add a "parallel" batch/direction
    # grid axis to use the second TensorCore on v7x for large batches.
    logits_pad = pl.pallas_call(
        lstm_classifier_kernel,
        out_shape=jax.ShapeDtypeStruct((b_pad, F), jnp.float32),
        in_specs=[_VMEM] * 6,
        out_specs=_VMEM,
        scratch_shapes=[
            pltpu.VMEM((T, b_pad, 4 * H), jnp.float32),  # xw_f
            pltpu.VMEM((T, b_pad, 4 * H), jnp.float32),  # xw_b
            pltpu.VMEM((T, b_pad, H), jnp.float32),      # hf_all
            pltpu.VMEM((T, b_pad, H), jnp.float32),      # hb_all
        ],
        compiler_params=pltpu.CompilerParams(
            vmem_limit_bytes=16 * 1024 * 1024),
    )(x_tm, params['w_ih'], params['w_hh'], params['b'],
      params['classifier']['w'], params['classifier']['b'])

    # self.dropout(last_output): eval-mode dropout == identity (applied above).
    return logits_pad[:B]


# ----------------------------------------------------------------------------
if __name__ == "__main__":
    n_vocab, embedding_dim, hidden_dim = 50, 16, 32
    n_layers, feature_n = 2, 4
    B, T = 2, 8

    key = jax.random.PRNGKey(0)
    k_param, k_ids = jax.random.split(key)
    params = init_params(k_param, n_vocab, embedding_dim, hidden_dim,
                         n_layers, feature_n)
    ids = jax.random.randint(k_ids, (B, T), 0, n_vocab, dtype=jnp.int32)

    logits = sentence_classifier_forward(params, ids)
    jax.block_until_ready(logits)
    assert logits.shape == (B, feature_n)
    print("KERNEL_OK")
</pallas_src>

<mosaic_0001>
module attributes {stable_mosaic.version = 11 : i64} {
  func.func @gather_kernel(%arg0: i32, %arg1: memref<16xi32, #tpu.memory_space<smem>>, %arg2: memref<1x1x16xf32, #tpu.memory_space<vmem>>, %arg3: memref<1x1x16xf32, #tpu.memory_space<vmem>>) attributes {dimension_semantics = [#tpu.dimension_semantics<arbitrary>], iteration_bounds = array<i64: 16>, scalar_prefetch = 1 : i64, scratch_operands = 0 : i64, tpu.core_type = #tpu.core_type<tc>, window_params = [{transform_indices = @transform_0, window_bounds = array<i64: 1, 1, 16>}, {transform_indices = @transform_1, window_bounds = array<i64: 1, 1, 16>}]} {
    %c0 = arith.constant 0 : index
    %c0_0 = arith.constant 0 : index
    %c0_1 = arith.constant 0 : index
    %0 = vector.load %arg2[%c0, %c0_0, %c0_1] : memref<1x1x16xf32, #tpu.memory_space<vmem>>, vector<1x1x16xf32>
    %c0_2 = arith.constant 0 : index
    %c0_3 = arith.constant 0 : index
    %c0_4 = arith.constant 0 : index
    %1 = vector.load %arg3[%c0_2, %c0_3, %c0_4] : memref<1x1x16xf32, #tpu.memory_space<vmem>>, vector<1x1x16xf32>
    tpu.vector_store %arg3[%c0_2, %c0_3, %c0_4], %0 {strides = array<i32>} : memref<1x1x16xf32, #tpu.memory_space<vmem>>, vector<1x1x16xf32>,
    return
  }
  func.func @transform_0(%arg0: i32, %arg1: memref<16xi32, #tpu.memory_space<smem>>) -> (i32, i32, i32) {
    %0 = arith.index_cast %arg0 : i32 to index
    %1 = memref.load %arg1[%0] : memref<16xi32, #tpu.memory_space<smem>>
    %c0_i32 = arith.constant 0 : i32
    %c0_i32_0 = arith.constant 0 : i32
    %c0_i32_1 = arith.constant 0 : i32
    return %1, %c0_i32, %c0_i32_0 : i32, i32, i32
  }
  func.func @transform_1(%arg0: i32, %arg1: memref<16xi32, #tpu.memory_space<smem>>) -> (i32, i32, i32) {
    %c0_i32 = arith.constant 0 : i32
    %c0_i32_0 = arith.constant 0 : i32
    %c0_i32_1 = arith.constant 0 : i32
    return %arg0, %c0_i32, %c0_i32_0 : i32, i32, i32
  }
}

</mosaic_0001>

<llo_original>
// kernel: tpu_custom_call.1
$region0: #{tpu_custom_call.1}
  #allocation0 [shape = 'u32[]', space=smem, size = 0x4, offset = 0x4, fixed_abs, tag = 'smem constant byte address 0x4 - core index']
  #allocation1 [shape = 'u32[144,128]{1,0:T(1,128)}', space=vmem, size = 0x12000, scoped, tag = 'internal scratch']
  #allocation2 [shape = 's32[1]{0}', space=sflag, size = 0x4, scoped, tag = 'scoped memory for tpu_custom_call.1']
  #allocation3 [shape = 'u8[512]{0}', space=smem, size = 0x200, scoped, tag = 'prefetched SMEM operand 0']
  %s0 = inlined_call_operand.vmem [shape: s32[16], index: 0, kind: input, shape index: {}]
  %s1 = inlined_call_operand.vmem [shape: f32[50,1,16], index: 1, kind: input, shape index: {}]
  %s2 = inlined_call_operand.hbm [shape: f32[16,1,16], index: 2, kind: output, shape index: {}]
  %s3 = sld [smem:[#allocation0]]
  $region37: #{tpu_custom_call.1} parent=0
    _
  %s5 = ssub.s32 1, %s3
  %s6 = scalar_select 0, %s5, %s3
  %s7 = sshll.u32 %s0, 4
  %s8 = int_to_ptr.vmem [resolvable:$true] %s7
  %10 = dma.vmem_to_smem %s8, 16, [#allocation3], [#allocation2]
  %11 = dma.done [#allocation2], 16
  %12 = sfence
  $region1: #{tpu_custom_call.1} parent=0
    #allocation4 [shape = 'u8[1024]{0}', space=vmem, size = 0x400, scoped, tag = 'output window, operand 0']
    #allocation5 [shape = 's32[2]{0}', space=sflag, size = 0x8, scoped, tag = 'scoped memory for tpu_custom_call.1']
    %13 = vsyncpa [#allocation5], 0
    %s14 = scalar_lea.sflag [#allocation5], 1
    %15 = vsyncpa %s14, 0
    loop: start=0, step=1, limit=18
    $region2: #{tpu_custom_call.1} parent=1 // loop_pre_header
      _
    $region3: #{tpu_custom_call.1} parent=1 // loop_header
      %s17 = sphi 0, %s21
      %p18 = scmp.ge.s32.totalorder %s17, 18
      %s29 = sphi 0, %s31
      %s32 = sphi 0, %s29
      %s33 = sphi 0, %s32
      %s49 = sphi 0, %s33
      %s55 = sphi 0, %s57
      %s58 = sphi 0, %s55
      %s59 = sphi 0, %s58
      %s75 = sphi 0, %s59
    $region4: #{tpu_custom_call.1} parent=1 // loop_header_branch
      %20 = sbr.rel (%p18) target = $region8
    $region5: #{tpu_custom_call.1} parent=1 // loop_body
      %s22 = ssub.s32 %s17, 1
      %s23 = ssub.s32 %s17, 2
      %s24 = sadd.s32 %s17, 1
      %s25 = sld [smem:[#allocation3 + %s17]]
      %s26 = sld [smem:[#allocation3 + %s24]]
      %s27 = ssub.s32 %s25, %s26
      %p28 = scmp.eq.s32.totalorder %s27, 0
      %s30 = sadd.s32 %s29, 1
      %s31 = scalar_select %p28, %s29, %s30
      %p34 = pneg %p28
      %p35 = scmp.eq.s32.totalorder %s17, 15
      %p36 = por %p34, %p35
      %p37 = scmp.ne.s32.totalorder %s29, %s32
      %p38 = scmp.eq.s32.totalorder %s17, 0
      %p39 = por %p37, %p38
      %p40 = scmp.ne.s32.totalorder %s29, %s32
      %p41 = scmp.eq.s32.totalorder %s22, 15
      %p42 = por %p40, %p41
      %p43 = scmp.ne.s32.totalorder %s32, %s33
      %p44 = scmp.eq.s32.totalorder %s22, 0
      %p45 = por %p43, %p44
      %p46 = scmp.ne.s32.totalorder %s32, %s33
      %p47 = scmp.eq.s32.totalorder %s23, 15
      %p48 = por %p46, %p47
      %p50 = scmp.ne.s32.totalorder %s33, %s49
      %p51 = scmp.eq.s32.totalorder %s23, 0
      %p52 = por %p50, %p51
      %s53 = ssub.s32 %s17, %s24
      %p54 = scmp.eq.s32.totalorder %s53, 0
      %s56 = sadd.s32 %s55, 1
      %s57 = scalar_select %p54, %s55, %s56
      %p60 = pneg %p54
      %p61 = scmp.eq.s32.totalorder %s17, 15
      %p62 = por %p60, %p61
      %p63 = scmp.ne.s32.totalorder %s55, %s58
      %p64 = scmp.eq.s32.totalorder %s17, 0
      %p65 = por %p63, %p64
      %p66 = scmp.ne.s32.totalorder %s55, %s58
      %p67 = scmp.eq.s32.totalorder %s22, 15
      %p68 = por %p66, %p67
      %p69 = scmp.ne.s32.totalorder %s58, %s59
      %p70 = scmp.eq.s32.totalorder %s22, 0
      %p71 = por %p69, %p70
      %p72 = scmp.ne.s32.totalorder %s58, %s59
      %p73 = scmp.eq.s32.totalorder %s23, 15
      %p74 = por %p72, %p73
      %p76 = scmp.ne.s32.totalorder %s59, %s75
      %p77 = scmp.eq.s32.totalorder %s23, 0
      %p78 = por %p76, %p77
      %p79 = scmp.le.s32.totalorder 1, %s17
      %p80 = scmp.lt.s32.totalorder %s17, 17
      %p81 = pnand %p79, %p80
      %p82 = pneg %p81
      // Predicated region
      $region9: #{tpu_custom_call.1} parent=5 // pred_check
        _
      $region10: #{tpu_custom_call.1} parent=5 // pred_check_branch
        %84 = sbr.rel (%p81) target = $region12
      $region11: #{tpu_custom_call.1} parent=5 // pred_region
        %s85 = ssub.s32 %s17, 1
      $region12: #{tpu_custom_call.1} parent=5 // pred_fallthru
        _
      %p86 = scmp.lt.s32.totalorder %s17, 16
      // Predicated region
      $region13: #{tpu_custom_call.1} parent=5 // pred_check
        %p87 = pneg %p86
      $region14: #{tpu_custom_call.1} parent=5 // pred_check_branch
        %89 = sbr.rel (%p87) target = $region16
      $region15: #{tpu_custom_call.1} parent=5 // pred_region
        // Predicated region
        $region17: #{tpu_custom_call.1} parent=15 // pred_check
          %p90 = pneg %p39
        $region18: #{tpu_custom_call.1} parent=15 // pred_check_branch
          %92 = sbr.rel (%p90) target = $region20
        $region19: #{tpu_custom_call.1} parent=15 // pred_region
          %s93 = sld [smem:[#allocation3 + %s17]]
          %p94 = scmp.lt.s32.totalorder %s93, 49
          %s95 = scalar_select %p94, %s93, 49
          %s96 = scalar_lea.vmem %s1, %s95
          %s97 = sld [smem:[#allocation3 + %s17]]
        $region20: #{tpu_custom_call.1} parent=15 // pred_fallthru
          _
      $region16: #{tpu_custom_call.1} parent=5 // pred_fallthru
        _
      %p98 = scmp.le.s32.totalorder 1, %s17
      %p99 = scmp.lt.s32.totalorder %s17, 17
      %p100 = pnand %p98, %p99
      %p101 = pneg %p100
      // Predicated region
      $region21: #{tpu_custom_call.1} parent=5 // pred_check
        _
      $region22: #{tpu_custom_call.1} parent=5 // pred_check_branch
        %103 = sbr.rel (%p100) target = $region24
      $region23: #{tpu_custom_call.1} parent=5 // pred_region
        %s104 = ssub.s32 %s17, 1
        %s105 = sld [smem:[#allocation3 + %s22]]
        %p106 = scmp.lt.s32.totalorder %s105, 49
        %s107 = scalar_select %p106, %s105, 49
        %s108 = scalar_lea.vmem %s1, %s107
        %p109 = pneg %p45
        %p110 = pneg %p42
        %p111 = pneg %p71
        %p112 = pneg %p68
        %s113 = sand.u32 %s58, 1
        %s114 = scalar_lea.sflag [#allocation5], %s113
        %s115 = sand.u32 %s58, 1
        %s116 = scalar_lea.vmem [#allocation4], %s115
        %s117 = sld [smem:[#allocation3 + %s22]]
        %p118 = scmp.lt.s32.totalorder %s117, 49
        %s119 = scalar_select %p118, %s117, 49
        %s120 = scalar_lea.vmem %s1, %s119
        %s121 = sld [smem:[#allocation3 + %s22]]
        %v122 = vld [vmem:[%s120] sm:$0x1]
        %vm123 = vcmask 122880
        %124 = vst.msk [vmem:[%s116] sm:$0x1] %vm123, %v122
        %s125 = sand.u32 %s58, 1
        %s126 = scalar_lea.sflag [#allocation5], %s125
        %s127 = sand.u32 %s58, 1
        %s128 = scalar_lea.vmem [#allocation4], %s127
        // Predicated region
        $region25: #{tpu_custom_call.1} parent=23 // pred_check
          %p129 = pneg %p68
        $region26: #{tpu_custom_call.1} parent=23 // pred_check_branch
          %131 = sbr.rel (%p129) target = $region28
        $region27: #{tpu_custom_call.1} parent=23 // pred_region
          %s133 = ssub.s32 16, 16
          %134 = vsyncadd %s126, %s133
          %s135 = smul.addr %s22, 16
          %s136 = scalar_lea.hbm %s2, %s135
          %s138 = sshll.u32 %s128, 4
          %s139 = int_to_ptr.vmem [resolvable:$true] %s138
          %141 = dma.vmem_to_hbm [thread:$0]  %s139, 16, %s136, %s126
        $region28: #{tpu_custom_call.1} parent=23 // pred_fallthru
          _
      $region24: #{tpu_custom_call.1} parent=5 // pred_fallthru
        _
      %p142 = scmp.le.s32.totalorder 2, %s17
      // Predicated region
      $region29: #{tpu_custom_call.1} parent=5 // pred_check
        %p143 = pneg %p142
      $region30: #{tpu_custom_call.1} parent=5 // pred_check_branch
        %145 = sbr.rel (%p143) target = $region32
      $region31: #{tpu_custom_call.1} parent=5 // pred_region
        %s146 = ssub.s32 %s17, 2
        // Predicated region
        $region33: #{tpu_custom_call.1} parent=31 // pred_check
          %p147 = pneg %p74
        $region34: #{tpu_custom_call.1} parent=31 // pred_check_branch
          %149 = sbr.rel (%p147) target = $region36
        $region35: #{tpu_custom_call.1} parent=31 // pred_region
          %s150 = sand.u32 %s59, 1
          %s151 = scalar_lea.sflag [#allocation5], %s150
          %s152 = sand.u32 %s59, 1
          %s153 = scalar_lea.vmem [#allocation4], %s152
          %154 = dma.done %s151, 16
        $region36: #{tpu_custom_call.1} parent=31 // pred_fallthru
          _
      $region32: #{tpu_custom_call.1} parent=5 // pred_fallthru
        _
    $region6: #{tpu_custom_call.1} parent=1 // loop_footer
      %s21 = sadd.s32 1, %s17
    $region7: #{tpu_custom_call.1} parent=1 // loop_footer_branch
      %16 = sbr.rel target = $region3
    $region8: #{tpu_custom_call.1} parent=1 // loop_exit
      _
    %155 = vsyncpa [#allocation5], 1
    %s156 = scalar_lea.sflag [#allocation5], 1
    %157 = vsyncpa %s156, 1

</llo_original>
